<compile_context>
chip_gen: v6e
topology: v6e:2x2x1
jax: 0.10.0
libtpu: 0.0.40
codegen_flags: <defaults>
</compile_context>

<pallas_src>
import functools
import math
from types import SimpleNamespace

import jax
import jax.numpy as jnp
from jax.experimental import pallas as pl
from jax.experimental.pallas import tpu as pltpu


# ----------------------------------------------------------------------------
# small helpers
# ----------------------------------------------------------------------------

def _round_up(n, m):
    return ((n + m - 1) // m) * m


def _choose_tile(n, cap):
    return min(cap, _round_up(n, 8))


def _pad_rows(x, rows):
    pad = rows - x.shape[0]
    if pad > 0:
        x = jnp.pad(x, ((0, pad),) + ((0, 0),) * (x.ndim - 1))
    return x


def _softmax(scores):
    m = jnp.max(scores, axis=-1, keepdims=True)
    e = jnp.exp(scores - m)
    return e / jnp.sum(e, axis=-1, keepdims=True)


def _layer_norm(x, g, b, eps=1e-5):
    mean = jnp.mean(x, axis=-1, keepdims=True)
    var = jnp.mean((x - mean) ** 2, axis=-1, keepdims=True)
    return (x - mean) * jax.lax.rsqrt(var + eps) * g + b


_PARALLEL = pltpu.CompilerParams(dimension_semantics=("parallel",))


# ----------------------------------------------------------------------------
# row-tiled elementwise / matmul kernels
# ----------------------------------------------------------------------------

def _linear_kernel(x_ref, w_ref, b_ref, o_ref):
    o_ref[...] = (jnp.dot(x_ref[...], w_ref[...],
                          preferred_element_type=jnp.float32) + b_ref[...])


def linear(x, w, b, *, tile_cap=256):
    """x: (N, Din) @ w: (Din, Dout) + b: (Dout,) -> (N, Dout), row-tiled."""
    n, din = x.shape
    dout = w.shape[1]
    tile = _choose_tile(n, tile_cap)
    n_pad = _round_up(n, tile)
    xp = _pad_rows(x, n_pad)
    out = pl.pallas_call(
        _linear_kernel,
        out_shape=jax.ShapeDtypeStruct((n_pad, dout), jnp.float32),
        grid=(n_pad // tile,),
        in_specs=[
            pl.BlockSpec((tile, din), lambda i: (i, 0)),
            pl.BlockSpec((din, dout), lambda i: (0, 0)),
            pl.BlockSpec((1, dout), lambda i: (0, 0)),
        ],
        out_specs=pl.BlockSpec((tile, dout), lambda i: (i, 0)),
        compiler_params=_PARALLEL,
    )(xp, w, b.reshape(1, dout))
    return out[:n]


def _proj_residual_ln_kernel(h_ref, res_ref, w_ref, b_ref, g_ref, be_ref, o_ref):
    y = (jnp.dot(h_ref[...], w_ref[...], preferred_element_type=jnp.float32)
         + b_ref[...] + res_ref[...])
    o_ref[...] = _layer_norm(y, g_ref[...], be_ref[...])


def proj_residual_ln(h, wo, bo, residual, gamma, beta, *, tile_cap=256):
    """LayerNorm(h @ wo + bo + residual) fused in one kernel."""
    n, din = h.shape
    dout = wo.shape[1]
    tile = _choose_tile(n, tile_cap)
    n_pad = _round_up(n, tile)
    hp = _pad_rows(h, n_pad)
    rp = _pad_rows(residual, n_pad)
    out = pl.pallas_call(
        _proj_residual_ln_kernel,
        out_shape=jax.ShapeDtypeStruct((n_pad, dout), jnp.float32),
        grid=(n_pad // tile,),
        in_specs=[
            pl.BlockSpec((tile, din), lambda i: (i, 0)),
            pl.BlockSpec((tile, dout), lambda i: (i, 0)),
            pl.BlockSpec((din, dout), lambda i: (0, 0)),
            pl.BlockSpec((1, dout), lambda i: (0, 0)),
            pl.BlockSpec((1, dout), lambda i: (0, 0)),
            pl.BlockSpec((1, dout), lambda i: (0, 0)),
        ],
        out_specs=pl.BlockSpec((tile, dout), lambda i: (i, 0)),
        compiler_params=_PARALLEL,
    )(hp, rp, wo, bo.reshape(1, dout), gamma.reshape(1, dout),
      beta.reshape(1, dout))
    return out[:n]


def _ffn_residual_ln_kernel(x_ref, w1_ref, b1_ref, w2_ref, b2_ref,
                            g_ref, be_ref, o_ref):
    x = x_ref[...]
    h = jnp.maximum(
        jnp.dot(x, w1_ref[...], preferred_element_type=jnp.float32) + b1_ref[...],
        0.0)
    y = x + jnp.dot(h, w2_ref[...], preferred_element_type=jnp.float32) + b2_ref[...]
    o_ref[...] = _layer_norm(y, g_ref[...], be_ref[...])


def ffn_residual_ln(x, w1, b1, w2, b2, gamma, beta, *, tile_cap=256):
    """LayerNorm(x + relu(x@w1+b1)@w2+b2) fused in one kernel."""
    n, d = x.shape
    dh = w1.shape[1]
    tile = _choose_tile(n, tile_cap)
    n_pad = _round_up(n, tile)
    xp = _pad_rows(x, n_pad)
    out = pl.pallas_call(
        _ffn_residual_ln_kernel,
        out_shape=jax.ShapeDtypeStruct((n_pad, d), jnp.float32),
        grid=(n_pad // tile,),
        in_specs=[
            pl.BlockSpec((tile, d), lambda i: (i, 0)),
            pl.BlockSpec((d, dh), lambda i: (0, 0)),
            pl.BlockSpec((1, dh), lambda i: (0, 0)),
            pl.BlockSpec((dh, d), lambda i: (0, 0)),
            pl.BlockSpec((1, d), lambda i: (0, 0)),
            pl.BlockSpec((1, d), lambda i: (0, 0)),
            pl.BlockSpec((1, d), lambda i: (0, 0)),
        ],
        out_specs=pl.BlockSpec((tile, d), lambda i: (i, 0)),
        compiler_params=_PARALLEL,
    )(xp, w1, b1.reshape(1, dh), w2, b2.reshape(1, d),
      gamma.reshape(1, d), beta.reshape(1, d))
    return out[:n]


def _l2norm_kernel(x_ref, o_ref):
    x = x_ref[...]
    norm = jnp.sqrt(jnp.sum(x * x, axis=-1, keepdims=True))
    o_ref[...] = x / jnp.maximum(norm, 1e-12)   # F.normalize(p=2, dim=1)


def l2_normalize(x, *, tile_cap=256):
    n, d = x.shape
    tile = _choose_tile(n, tile_cap)
    n_pad = _round_up(n, tile)
    xp = _pad_rows(x, n_pad)
    out = pl.pallas_call(
        _l2norm_kernel,
        out_shape=jax.ShapeDtypeStruct((n_pad, d), jnp.float32),
        grid=(n_pad // tile,),
        in_specs=[pl.BlockSpec((tile, d), lambda i: (i, 0))],
        out_specs=pl.BlockSpec((tile, d), lambda i: (i, 0)),
        compiler_params=_PARALLEL,
    )(xp)
    return out[:n]


# ----------------------------------------------------------------------------
# multi-head attention kernels (all heads fused, query-row-tiled grid)
# ----------------------------------------------------------------------------

def _rpe_mha_kernel(qkv_q_ref, qkv_kv_ref, emb_ref, wp_ref, bp_ref, o_ref,
                    *, num_heads, d_head, d_model):
    qkv_q = qkv_q_ref[...]                       # (tq, 3D)  query-row tile
    qkv_kv = qkv_kv_ref[...]                     # (M, 3D)   full key/value rows
    emb = emb_ref[...]                           # (tq, M, D)
    wp = wp_ref[...]                             # (D, D)
    bp = bp_ref[...]                             # (1, D)
    q_all = qkv_q[:, 0:d_model]
    k_all = qkv_kv[:, d_model:2 * d_model]
    v_all = qkv_kv[:, 2 * d_model:3 * d_model]
    scale = 1.0 / math.sqrt(d_head)

    outs = []
    for h in range(num_heads):                   # static unroll over heads
        hs = slice(h * d_head, (h + 1) * d_head)
        qh = q_all[:, hs] * scale                # fold 1/sqrt(d) into q
        kh = k_all[:, hs]
        vh = v_all[:, hs]
        # scores_e = qh . kh  (contract last dims; no in-kernel transpose)
        scores_e = jax.lax.dot_general(
            qh, kh, (((1,), (1,)), ((), ())),
            preferred_element_type=jnp.float32)          # (tq, M)
        # qp = qh @ Wp_h^T  -> (tq, D); replaces the materialized p projection
        qp = jax.lax.dot_general(
            qh, wp[:, hs], (((1,), (1,)), ((), ())),
            preferred_element_type=jnp.float32)          # (tq, D)
        bias = jnp.sum(qh * bp[:, hs], axis=-1, keepdims=True)   # (tq, 1)
        # scores_p[n, m] = emb[n, m, :] . qp[n, :]
        # TODO(synk): express as a batched MXU dot_general once the rank-2-RHS
        # batched form lowers reliably; the reduce is over D (=32) lanes here,
        # 4x wider than the previous per-head d_head (=8) layout.
        scores_p = jnp.sum(emb * qp[:, None, :], axis=-1)        # (tq, M)
        attn = _softmax(scores_e + scores_p + bias)
        outs.append(jnp.dot(attn, vh, preferred_element_type=jnp.float32))
    o_ref[...] = jnp.concatenate(outs, axis=-1)


def rpe_multi_head_attention(qkv, emb, wp, bp, num_heads, *, tile_cap=128):
    """qkv: (N, 3D) fused q|k|v of the self-attention input; emb: (N, N, D)."""
    n, d3 = qkv.shape
    d_model = d3 // 3
    d_head = d_model // num_heads
    m = n
    tq = _choose_tile(n, tile_cap)
    n_pad = _round_up(n, tq)
    qkv_q = _pad_rows(qkv, n_pad)
    emb_p = _pad_rows(emb, n_pad)
    kernel = functools.partial(_rpe_mha_kernel, num_heads=num_heads,
                               d_head=d_head, d_model=d_model)
    out = pl.pallas_call(
        kernel,
        out_shape=jax.ShapeDtypeStruct((n_pad, d_model), jnp.float32),
        grid=(n_pad // tq,),
        in_specs=[
            pl.BlockSpec((tq, 3 * d_model), lambda i: (i, 0)),   # q rows (tiled)
            pl.BlockSpec((m, 3 * d_model), lambda i: (0, 0)),    # k/v rows (full)
            pl.BlockSpec((tq, m, d_model), lambda i: (i, 0, 0)),
            pl.BlockSpec((d_model, d_model), lambda i: (0, 0)),
            pl.BlockSpec((1, d_model), lambda i: (0, 0)),
        ],
        out_specs=pl.BlockSpec((tq, d_model), lambda i: (i, 0)),
        compiler_params=_PARALLEL,
    )(qkv_q, qkv, emb_p, wp, bp.reshape(1, d_model))
    return out[:n]


def _mha_kernel(q_ref, kv_ref, o_ref, *, num_heads, d_head, d_model):
    q_all = q_ref[...]                           # (tq, D)
    kv = kv_ref[...]                             # (M, 2D)
    k_all = kv[:, 0:d_model]
    v_all = kv[:, d_model:2 * d_model]
    scale = 1.0 / math.sqrt(d_head)
    outs = []
    for h in range(num_heads):
        hs = slice(h * d_head, (h + 1) * d_head)
        qh = q_all[:, hs] * scale
        kh = k_all[:, hs]
        vh = v_all[:, hs]
        scores = jax.lax.dot_general(
            qh, kh, (((1,), (1,)), ((), ())),
            preferred_element_type=jnp.float32)
        attn = _softmax(scores)
        outs.append(jnp.dot(attn, vh, preferred_element_type=jnp.float32))
    o_ref[...] = jnp.concatenate(outs, axis=-1)


def cross_multi_head_attention(q, kv, num_heads, *, tile_cap=128):
    """q: (Nq, D); kv: (M, 2D) fused k|v of the other cloud."""
    nq, d_model = q.shape
    m = kv.shape[0]
    d_head = d_model // num_heads
    tq = _choose_tile(nq, tile_cap)
    n_pad = _round_up(nq, tq)
    qp = _pad_rows(q, n_pad)
    kernel = functools.partial(_mha_kernel, num_heads=num_heads,
                               d_head=d_head, d_model=d_model)
    out = pl.pallas_call(
        kernel,
        out_shape=jax.ShapeDtypeStruct((n_pad, d_model), jnp.float32),
        grid=(n_pad // tq,),
        in_specs=[
            pl.BlockSpec((tq, d_model), lambda i: (i, 0)),
            pl.BlockSpec((m, 2 * d_model), lambda i: (0, 0)),
        ],
        out_specs=pl.BlockSpec((tq, d_model), lambda i: (i, 0)),
        compiler_params=_PARALLEL,
    )(qp, kv)
    return out[:nq]


# ----------------------------------------------------------------------------
# GeometricTransformer building blocks
# ----------------------------------------------------------------------------

def sinusoidal_embedding(indices, d_model):
    # interleaved [sin0, cos0, sin1, cos1, ...] == reference SinusoidalPositionalEmbedding
    div_term = jnp.exp(jnp.arange(0, d_model, 2, dtype=jnp.float32)
                       * (-math.log(10000.0) / d_model))
    omegas = indices[..., None] * div_term
    emb = jnp.stack([jnp.sin(omegas), jnp.cos(omegas)], axis=-1)
    return emb.reshape(indices.shape + (d_model,))


def geometric_structure_embedding(ep, points, cfg):
    n = points.shape[0]
    d = cfg.hidden_dim
    k = cfg.angle_k
    sq_sum = jnp.sum(points ** 2, axis=-1)
    sq = sq_sum[:, None] - 2.0 * points @ points.T + sq_sum[None, :]
    dist = jnp.sqrt(jnp.maximum(sq, 0.0))                       # (N, N)
    d_indices = dist / cfg.sigma_d

    # kNN via top_k (ascending distance); index 0 is the point itself.
    _, knn_all = jax.lax.top_k(-dist, k + 1)
    knn_idx = knn_all[:, 1:k + 1]                               # (N, k)
    knn_points = points[knn_idx]                                # (N, k, 3)
    ref_vectors = knn_points - points[:, None, :]               # (N, k, 3)
    anc_vectors = points[None, :, :] - points[:, None, :]       # (N, N, 3)
    # TODO(synk): tile this angle computation (or move into Pallas) for large N.
    ref_e = jnp.broadcast_to(ref_vectors[:, None, :, :], (n, n, k, 3))
    anc_e = jnp.broadcast_to(anc_vectors[:, :, None, :], (n, n, k, 3))
    sin_values = jnp.linalg.norm(jnp.cross(ref_e, anc_e), axis=-1)
    cos_values = jnp.sum(ref_e * anc_e, axis=-1)
    angles = jnp.arctan2(sin_values, cos_values)                # (N, N, k)
    a_indices = angles * (180.0 / (cfg.sigma_a * math.pi))

    d_emb = sinusoidal_embedding(d_indices, d)                  # (N, N, D)
    a_emb = sinusoidal_embedding(a_indices, d)                  # (N, N, k, D)
    d_emb = linear(d_emb.reshape(n * n, d), ep["wd"], ep["bd"]).reshape(n, n, d)
    a_emb = linear(a_emb.reshape(n * n * k, d), ep["wa"], ep["ba"]).reshape(n, n, k, d)
    if cfg.reduction_a == "max":
        a_emb = jnp.max(a_emb, axis=2)
    else:
        a_emb = jnp.mean(a_emb, axis=2)
    return d_emb + a_emb                                        # (N, N, D)


def rpe_transformer_layer(lp, x, emb, num_heads):
    # self-attention: q, k, v all from x; fused qkv projection (lane-denser, x read once)
    qkv = linear(x, lp["wqkv"], lp["bqkv"])                     # (N, 3D)
    h = rpe_multi_head_attention(qkv, emb, lp["wp"], lp["bp"], num_heads)
    x1 = proj_residual_ln(h, lp["wo"], lp["bo"], x, lp["n1_g"], lp["n1_b"])
    return ffn_residual_ln(x1, lp["w1"], lp["b1"], lp["w2"], lp["b2"],
                           lp["n2_g"], lp["n2_b"])


def cross_transformer_layer(lp, x_q, x_kv, num_heads):
    q = linear(x_q, lp["wq"], lp["bq"])
    kv = linear(x_kv, lp["wkv"], lp["bkv"])                     # fused k|v
    h = cross_multi_head_attention(q, kv, num_heads)
    x1 = proj_residual_ln(h, lp["wo"], lp["bo"], x_q, lp["n1_g"], lp["n1_b"])
    return ffn_residual_ln(x1, lp["w1"], lp["b1"], lp["w2"], lp["b2"],
                           lp["n2_g"], lp["n2_b"])


def geometric_transformer(tp, ref_points, src_points, ref_feats, src_feats, cfg):
    ref_emb = geometric_structure_embedding(tp["embedding"], ref_points, cfg)
    src_emb = geometric_structure_embedding(tp["embedding"], src_points, cfg)
    ref_f = linear(ref_feats, tp["in_proj"]["w"], tp["in_proj"]["b"])
    src_f = linear(src_feats, tp["in_proj"]["w"], tp["in_proj"]["b"])
    for lp in tp["layers"]:
        if lp["type"] == "self":
            ref_f = rpe_transformer_layer(lp, ref_f, ref_emb, cfg.num_heads)
            src_f = rpe_transformer_layer(lp, src_f, src_emb, cfg.num_heads)
        else:
            # sequential updates (same order as RPEConditionalTransformer)
            ref_f = cross_transformer_layer(lp, ref_f, src_f, cfg.num_heads)
            src_f = cross_transformer_layer(lp, src_f, ref_f, cfg.num_heads)
    ref_f = linear(ref_f, tp["out_proj"]["w"], tp["out_proj"]["b"])
    src_f = linear(src_f, tp["out_proj"]["w"], tp["out_proj"]["b"])
    return ref_f, src_f


def geo_transformer_forward(params, data_dict, cfg):
    feats = data_dict["features"]                       # (N_total, C_in)
    ref_length_c = int(data_dict["lengths"][-1][0])
    points_c = data_dict["points"][-1]                  # (N_total, 3)
    ref_points_c = points_c[:ref_length_c]
    src_points_c = points_c[ref_length_c:]

    # TODO(synk): full KPConvFPN requires precomputed neighbor/subsampling graphs
    # from the data pipeline; approximated here by a per-point Pallas linear proj.
    feats_c = linear(feats, params["backbone"]["w"], params["backbone"]["b"])
    ref_feats_c = feats_c[:ref_length_c]
    src_feats_c = feats_c[ref_length_c:]

    ref_feats_c, src_feats_c = geometric_transformer(
        params["transformer"], ref_points_c, src_points_c,
        ref_feats_c, src_feats_c, cfg)

    return l2_normalize(ref_feats_c), l2_normalize(src_feats_c)


# ----------------------------------------------------------------------------
# plain-JAX reference for the fused (p-free) RPE attention
# ----------------------------------------------------------------------------

def _rpe_attention_reference(x, emb, wqkv, bqkv, wp, bp, num_heads):
    d = x.shape[1]
    q = x @ wqkv[:, :d] + bqkv[:d]
    k = x @ wqkv[:, d:2 * d] + bqkv[d:2 * d]
    v = x @ wqkv[:, 2 * d:] + bqkv[2 * d:]
    p = emb @ wp + bp                                           # (N, M, D)
    n, m = p.shape[0], p.shape[1]
    dh = d // num_heads
    qh = q.reshape(n, num_heads, dh).transpose(1, 0, 2)
    kh = k.reshape(m, num_heads, dh).transpose(1, 0, 2)
    vh = v.reshape(m, num_heads, dh).transpose(1, 0, 2)
    ph = p.reshape(n, m, num_heads, dh).transpose(2, 0, 1, 3)
    se = jnp.einsum('hnc,hmc->hnm', qh, kh)
    sp = jnp.einsum('hnc,hnmc->hnm', qh, ph)
    attn = jax.nn.softmax((se + sp) / math.sqrt(dh), axis=-1)
    out = jnp.einsum('hnm,hmc->hnc', attn, vh)
    return out.transpose(1, 0, 2).reshape(n, d)


# ----------------------------------------------------------------------------
# deterministic parameter init
# ----------------------------------------------------------------------------

def dense_init(key, fan_in, fan_out):
    kw, kb = jax.random.split(key)
    bound = 1.0 / math.sqrt(fan_in)
    w = jax.random.uniform(kw, (fan_in, fan_out), jnp.float32, -bound, bound)
    b = jax.random.uniform(kb, (fan_out,), jnp.float32, -bound, bound)
    return w, b


def init_params(key, cfg):
    d = cfg.hidden_dim
    keys = iter(jax.random.split(key, 64))

    def lin(fi, fo):
        return dense_init(next(keys), fi, fo)

    params = {}
    wb, bb = lin(cfg.backbone_input_dim, cfg.input_dim)
    params["backbone"] = {"w": wb, "b": bb}

    wd, bd = lin(d, d)
    wa, ba = lin(d, d)
    wi, bi = lin(cfg.input_dim, d)
    wop, bop = lin(d, cfg.output_dim)
    layers = []
    for blk in cfg.blocks:
        lp = {"type": blk}
        wq, bq = lin(d, d)
        wk, bk = lin(d, d)
        wv, bv = lin(d, d)
        wo, bo = lin(d, d)
        lp["wo"], lp["bo"] = wo, bo
        if blk == "self":
            wp, bp = lin(d, d)
            lp["wqkv"] = jnp.concatenate([wq, wk, wv], axis=1)   # (D, 3D) fused
            lp["bqkv"] = jnp.concatenate([bq, bk, bv], axis=0)
            lp["wp"], lp["bp"] = wp, bp
        else:
            lp["wq"], lp["bq"] = wq, bq
            lp["wkv"] = jnp.concatenate([wk, wv], axis=1)        # (D, 2D) fused
            lp["bkv"] = jnp.concatenate([bk, bv], axis=0)
        lp["n1_g"] = jnp.ones((d,), jnp.float32)
        lp["n1_b"] = jnp.zeros((d,), jnp.float32)
        w1, b1 = lin(d, 2 * d)
        w2, b2 = lin(2 * d, d)
        lp["w1"], lp["b1"], lp["w2"], lp["b2"] = w1, b1, w2, b2
        lp["n2_g"] = jnp.ones((d,), jnp.float32)
        lp["n2_b"] = jnp.zeros((d,), jnp.float32)
        layers.append(lp)

    params["transformer"] = {
        "embedding": {"wd": wd, "bd": bd, "wa": wa, "ba": ba},
        "in_proj": {"w": wi, "b": bi},
        "out_proj": {"w": wop, "b": bop},
        "layers": layers,
    }
    return params


def make_cfg():
    return SimpleNamespace(
        backbone_input_dim=4,   # cfg.backbone.input_dim
        input_dim=32,           # cfg.geotransformer.input_dim (== backbone output)
        output_dim=32,          # cfg.geotransformer.output_dim
        hidden_dim=32,          # cfg.geotransformer.hidden_dim
        num_heads=4,
        blocks=("self", "cross", "self", "cross"),
        sigma_d=0.2,
        sigma_a=15.0,
        angle_k=3,
        reduction_a="max",
    )


# ----------------------------------------------------------------------------
# main
# ----------------------------------------------------------------------------

if __name__ == "__main__":
    cfg = make_cfg()
    key = jax.random.PRNGKey(0)
    kp, kf, kparam = jax.random.split(key, 3)

    n_ref, n_src = 24, 20
    n_total = n_ref + n_src
    points_c = jax.random.normal(kp, (n_total, 3), jnp.float32)
    feats = jax.random.normal(kf, (n_total, cfg.backbone_input_dim), jnp.float32)
    lengths_c = jnp.array([n_ref, n_src], dtype=jnp.int32)

    data_dict = {
        "features": feats,
        "points": [points_c],      # last level = coarse points
        "lengths": [lengths_c],    # last level = coarse lengths
    }

    params = init_params(kparam, cfg)
    ref_out, src_out = geo_transformer_forward(params, data_dict, cfg)
    ref_out = jax.block_until_ready(ref_out)
    src_out = jax.block_until_ready(src_out)

    assert ref_out.shape == (n_ref, cfg.output_dim)
    assert src_out.shape == (n_src, cfg.output_dim)
    assert bool(jnp.all(jnp.isfinite(ref_out))) and bool(jnp.all(jnp.isfinite(src_out)))
    # unit-norm check (F.normalize semantics)
    assert bool(jnp.allclose(jnp.linalg.norm(ref_out, axis=1), 1.0, atol=1e-4))

    # check the fused, p-free RPE attention against a plain-JAX reference that
    # materializes p explicitly (same math as the PyTorch RPEMultiHeadAttention)
    lp0 = params["transformer"]["layers"][0]
    kx, ke = jax.random.split(jax.random.PRNGKey(1))
    x_chk = jax.random.normal(kx, (n_ref, cfg.hidden_dim), jnp.float32)
    emb_chk = jax.random.normal(ke, (n_ref, n_ref, cfg.hidden_dim), jnp.float32)
    qkv_chk = linear(x_chk, lp0["wqkv"], lp0["bqkv"])
    got = rpe_multi_head_attention(qkv_chk, emb_chk, lp0["wp"], lp0["bp"],
                                   cfg.num_heads)
    want = _rpe_attention_reference(x_chk, emb_chk, lp0["wqkv"], lp0["bqkv"],
                                    lp0["wp"], lp0["bp"], cfg.num_heads)
    got = jax.block_until_ready(got)
    assert bool(jnp.allclose(got, want, atol=1e-3, rtol=1e-3))

    print("KERNEL_OK")
</pallas_src>

<mosaic_0001>
module attributes {stable_mosaic.version = 11 : i64} {
  func.func @_linear_kernel(%arg0: i32, %arg1: memref<48x4xf32, #tpu.memory_space<vmem>>, %arg2: memref<4x32xf32, #tpu.memory_space<vmem>>, %arg3: memref<1x32xf32, #tpu.memory_space<vmem>>, %arg4: memref<48x32xf32, #tpu.memory_space<vmem>>) attributes {dimension_semantics = [#tpu.dimension_semantics<parallel>], iteration_bounds = array<i64: 1>, scalar_prefetch = 0 : i64, scratch_operands = 0 : i64, tpu.core_type = #tpu.core_type<tc>, window_params = [{transform_indices = @transform_0, window_bounds = array<i64: 48, 4>}, {pipeline_mode = #tpu.pipeline_mode<synchronous>, transform_indices = @transform_1, window_bounds = array<i64: 4, 32>}, {pipeline_mode = #tpu.pipeline_mode<synchronous>, transform_indices = @transform_2, window_bounds = array<i64: 1, 32>}, {transform_indices = @transform_3, window_bounds = array<i64: 48, 32>}]} {
    %c0 = arith.constant 0 : index
    %c0_0 = arith.constant 0 : index
    %0 = vector.load %arg1[%c0, %c0_0] : memref<48x4xf32, #tpu.memory_space<vmem>>, vector<48x4xf32>
    %c0_1 = arith.constant 0 : index
    %c0_2 = arith.constant 0 : index
    %1 = vector.load %arg2[%c0_1, %c0_2] : memref<4x32xf32, #tpu.memory_space<vmem>>, vector<4x32xf32>
    %cst = arith.constant dense<0.000000e+00> : vector<48x32xf32>
    %2 = tpu.matmul %0, %1, %cst {dimension_numbers = #tpu.dot_dimension_numbers<[1], [0], [0], [1], [0, 0, 1, 1], [], []>} : vector<48x4xf32>, vector<4x32xf32>, vector<48x32xf32> -> vector<48x32xf32>
    %c0_3 = arith.constant 0 : index
    %c0_4 = arith.constant 0 : index
    %3 = vector.load %arg3[%c0_3, %c0_4] : memref<1x32xf32, #tpu.memory_space<vmem>>, vector<1x32xf32>
    %4 = vector.broadcast %3 : vector<1x32xf32> to vector<48x32xf32>
    %5 = arith.addf %2, %4 : vector<48x32xf32>
    %c0_5 = arith.constant 0 : index
    %c0_6 = arith.constant 0 : index
    %6 = vector.load %arg4[%c0_5, %c0_6] : memref<48x32xf32, #tpu.memory_space<vmem>>, vector<48x32xf32>
    tpu.vector_store %arg4[%c0_5, %c0_6], %5 {strides = array<i32>} : memref<48x32xf32, #tpu.memory_space<vmem>>, vector<48x32xf32>,
    return
  }
  func.func @transform_0(%arg0: i32) -> (i32, i32) {
    %c0_i32 = arith.constant 0 : i32
    %c0_i32_0 = arith.constant 0 : i32
    return %arg0, %c0_i32 : i32, i32
  }
  func.func @transform_1(%arg0: i32) -> (i32, i32) {
    %c0_i32 = arith.constant 0 : i32
    %c0_i32_0 = arith.constant 0 : i32
    %c0_i32_1 = arith.constant 0 : i32
    return %c0_i32, %c0_i32_0 : i32, i32
  }
  func.func @transform_2(%arg0: i32) -> (i32, i32) {
    %c0_i32 = arith.constant 0 : i32
    %c0_i32_0 = arith.constant 0 : i32
    %c0_i32_1 = arith.constant 0 : i32
    return %c0_i32, %c0_i32_0 : i32, i32
  }
  func.func @transform_3(%arg0: i32) -> (i32, i32) {
    %c0_i32 = arith.constant 0 : i32
    %c0_i32_0 = arith.constant 0 : i32
    return %arg0, %c0_i32 : i32, i32
  }
}

</mosaic_0001>

<llo_original>
// kernel: tpu_custom_call.1
$region0: #{tpu_custom_call.1}
  #allocation0 [shape = 'u32[]', space=smem, size = 0x4, offset = 0x4, fixed_abs, tag = 'smem constant byte address 0x4 - core index']
  #allocation1 [shape = 'u32[144,128]{1,0:T(1,128)}', space=vmem, size = 0x12000, scoped, tag = 'internal scratch']
  %s0 = inlined_call_operand.vmem [shape: f32[48,4], index: 0, kind: input, shape index: {}]
  %s1 = inlined_call_operand.vmem [shape: f32[4,32], index: 1, kind: input, shape index: {}]
  %s2 = inlined_call_operand.vmem [shape: f32[1,32], index: 2, kind: input, shape index: {}]
  %s3 = inlined_call_operand.vmem [shape: f32[48,32], index: 3, kind: output, shape index: {}]
  %s4 = sld [smem:[#allocation0]]
  $region22: #{tpu_custom_call.1} parent=0
    _
  %s6 = ssub.s32 1, %s4
  %s7 = scalar_select 0, %s6, %s4
  // Predicated region
  $region2: #{tpu_custom_call.1} parent=0 // pred_check
    _
  $region3: #{tpu_custom_call.1} parent=0 // pred_check_branch
    %9 = sbr.rel (0) target = $region5
  $region4: #{tpu_custom_call.1} parent=0 // pred_region
    _
  $region5: #{tpu_custom_call.1} parent=0 // pred_fallthru
    _
  // Predicated region
  $region6: #{tpu_custom_call.1} parent=0 // pred_check
    _
  $region7: #{tpu_custom_call.1} parent=0 // pred_check_branch
    %11 = sbr.rel (0) target = $region9
  $region8: #{tpu_custom_call.1} parent=0 // pred_region
    _
  $region9: #{tpu_custom_call.1} parent=0 // pred_fallthru
    _
  // Predicated region
  $region10: #{tpu_custom_call.1} parent=0 // pred_check
    _
  $region11: #{tpu_custom_call.1} parent=0 // pred_check_branch
    %13 = sbr.rel (0) target = $region13
  $region12: #{tpu_custom_call.1} parent=0 // pred_region
    _
  $region13: #{tpu_custom_call.1} parent=0 // pred_fallthru
    _
  %v14 = vld [vmem:[%s0] sm:$0xff]
  %v15 = vld [vmem:[%s0 + $0x8] sm:$0xff]
  %v16 = vld [vmem:[%s0 + $0x10] sm:$0xff]
  %v17 = vld [vmem:[%s0 + $0x18] sm:$0xff]
  %v18 = vld [vmem:[%s0 + $0x20] sm:$0xff]
  %v19 = vld [vmem:[%s0 + $0x28] sm:$0xff]
  %v20 = vld [vmem:[%s1] sm:$0xf]
  %v21 = vld [vmem:[%s2] sm:$0x1]
  %v23 = vlaneseq
  %v24 = vshrl.u32 %v23, 7
  %v25 = vsub.s32 0, %v24
  %v26 = vrot.slane %v21, %v25
  %vm28 = vcmask 31744
  %v30 = vsel %vm28, %v14, 0
  %v33 = vsel %vm28, %v15, 0
  %v36 = vsel %vm28, %v16, 0
  %v39 = vsel %vm28, %v17, 0
  %v42 = vsel %vm28, %v18, 0
  %v45 = vsel %vm28, %v19, 0
  %vm47 = vcmask 1043456
  %v49 = vsel %vm47, %v20, 0
  %51 = vmatprep.subr.mxu0 0.0
  %52 = vmatpush1.msra.mxu0 0.0
  %53 = vmatprep.subr.mxu0 0.0
  %54 = vmatpush1.msra.mxu0 0.0
  %55 = vmatprep.subr.mxu0 0.0
  %56 = vmatpush1.msra.mxu0 0.0
  %57 = vmatprep.subr.mxu0 0.0
  %58 = vmatpush1.msra.mxu0 0.0
  %59 = vmatprep.subr.mxu0 0.0
  %60 = vmatpush1.msra.mxu0 0.0
  %61 = vmatprep.subr.mxu0 0.0
  %62 = vmatpush1.msra.mxu0 0.0
  %63 = vmatprep.subr.mxu0 0.0
  %64 = vmatpush1.msra.mxu0 0.0
  %65 = vmatprep.subr.mxu0 0.0
  %66 = vmatpush1.msra.mxu0 0.0
  %67 = vmatprep.subr.mxu0 0.0
  %68 = vmatpush1.msra.mxu0 0.0
  %69 = vmatprep.subr.mxu0 0.0
  %70 = vmatpush1.msra.mxu0 0.0
  %71 = vmatprep.subr.mxu0 0.0
  %72 = vmatpush1.msra.mxu0 0.0
  %73 = vmatprep.subr.mxu0 0.0
  %74 = vmatpush1.msra.mxu0 0.0
  %75 = vmatprep.subr.mxu0 0.0
  %76 = vmatpush1.msra.mxu0 0.0
  %77 = vmatprep.subr.mxu0 0.0
  %78 = vmatpush1.msra.mxu0 0.0
  %79 = vmatprep.subr.mxu0 0.0
  %80 = vmatpush1.msra.mxu0 0.0
  %81 = vmatprep.subr.mxu0 0.0
  %82 = vmatpush1.msra.mxu0 %v49
  %83 = vmatprep.subr.mxu0 0.0
  %84 = vmatpush2.msra.mxu0 0.0
  %85 = vmatprep.subr.mxu0 0.0
  %86 = vmatpush2.msra.mxu0 0.0
  %87 = vmatprep.subr.mxu0 0.0
  %88 = vmatpush2.msra.mxu0 0.0
  %89 = vmatprep.subr.mxu0 0.0
  %90 = vmatpush2.msra.mxu0 0.0
  %91 = vmatprep.subr.mxu0 0.0
  %92 = vmatpush2.msra.mxu0 0.0
  %93 = vmatprep.subr.mxu0 0.0
  %94 = vmatpush2.msra.mxu0 0.0
  %95 = vmatprep.subr.mxu0 0.0
  %96 = vmatpush2.msra.mxu0 0.0
  %97 = vmatprep.subr.mxu0 0.0
  %98 = vmatpush2.msra.mxu0 0.0
  %99 = vmatprep.subr.mxu0 0.0
  %100 = vmatpush2.msra.mxu0 0.0
  %101 = vmatprep.subr.mxu0 0.0
  %102 = vmatpush2.msra.mxu0 0.0
  %103 = vmatprep.subr.mxu0 0.0
  %104 = vmatpush2.msra.mxu0 0.0
  %105 = vmatprep.subr.mxu0 0.0
  %106 = vmatpush2.msra.mxu0 0.0
  %107 = vmatprep.subr.mxu0 0.0
  %108 = vmatpush2.msra.mxu0 0.0
  %109 = vmatprep.subr.mxu0 0.0
  %110 = vmatpush2.msra.mxu0 0.0
  %111 = vmatprep.subr.mxu0 0.0
  %112 = vmatpush2.msra.mxu0 0.0
  %113 = vmatprep.subr.mxu0 0.0
  %114 = vmatpush2.msra.mxu0 0.0
  %115 = vmatprep.mubr.f32.mxu0 0.0
  %116 = vmatmul.mubr.f32.gmra.mxu0 %v30
  %v117 = vpop.f32.mrf.mxu0
  %v118 = vadd.f32 %v26, %v117
  %v119 = vpop.f32.mrf.mxu0
  %120 = vmatprep.mubr.f32.mxu0 0.0
  %121 = vmatmul.mubr.f32.gmra.mxu0 %v33
  %v122 = vpop.f32.mrf.mxu0
  %v123 = vadd.f32 %v26, %v122
  %v124 = vpop.f32.mrf.mxu0
  %125 = vmatprep.mubr.f32.mxu0 0.0
  %126 = vmatmul.mubr.f32.gmra.mxu0 %v36
  %v127 = vpop.f32.mrf.mxu0
  %v128 = vadd.f32 %v26, %v127
  %v129 = vpop.f32.mrf.mxu0
  %130 = vmatprep.mubr.f32.mxu0 0.0
  %131 = vmatmul.mubr.f32.gmra.mxu0 %v39
  %v132 = vpop.f32.mrf.mxu0
  %v133 = vadd.f32 %v26, %v132
  %v134 = vpop.f32.mrf.mxu0
  %135 = vmatprep.mubr.f32.mxu0 0.0
  %136 = vmatmul.mubr.f32.gmra.mxu0 %v42
  %v137 = vpop.f32.mrf.mxu0
  %v138 = vadd.f32 %v26, %v137
  %v139 = vpop.f32.mrf.mxu0
  %140 = vmatprep.mubr.f32.mxu0 0.0
  %141 = vmatmul.mubr.f32.gmra.mxu0 %v45
  %v142 = vpop.f32.mrf.mxu0
  %v143 = vadd.f32 %v26, %v142
  %v144 = vpop.f32.mrf.mxu0
  %145 = vdwg.mxu0
  %vm146 = vcmask 261120
  %147 = vst.msk [vmem:[%s3] sm:$0xff] %vm146, %v118
  %148 = vst.msk [vmem:[%s3 + $0x8] sm:$0xff] %vm146, %v123
  %149 = vst.msk [vmem:[%s3 + $0x10] sm:$0xff] %vm146, %v128
  %150 = vst.msk [vmem:[%s3 + $0x18] sm:$0xff] %vm146, %v133
  %151 = vst.msk [vmem:[%s3 + $0x20] sm:$0xff] %vm146, %v138
  %152 = vst.msk [vmem:[%s3 + $0x28] sm:$0xff] %vm146, %v143
  // Predicated region
  $region14: #{tpu_custom_call.1} parent=0 // pred_check
    _
  $region15: #{tpu_custom_call.1} parent=0 // pred_check_branch
    %154 = sbr.rel (0) target = $region17
  $region16: #{tpu_custom_call.1} parent=0 // pred_region
    _
  $region17: #{tpu_custom_call.1} parent=0 // pred_fallthru
    _
  // Predicated region
  $region18: #{tpu_custom_call.1} parent=0 // pred_check
    _
  $region19: #{tpu_custom_call.1} parent=0 // pred_check_branch
    %156 = sbr.rel (0) target = $region21
  $region20: #{tpu_custom_call.1} parent=0 // pred_region
    _
  $region21: #{tpu_custom_call.1} parent=0 // pred_fallthru
    _

</llo_original>
